<compile_context>
chip_gen: v7x
topology: tpu7x:2x2x1
jax: 0.10.0
libtpu: 0.0.40
codegen_flags: <defaults>
</compile_context>

<pallas_src>
import functools

import jax
import jax.numpy as jnp
from jax.experimental import pallas as pl
from jax.experimental.pallas import tpu as pltpu


def _cat_tanh_kernel(x_ref, o_ref, *, compute_dtype):
    # x_ref: (TB, D), o_ref: (TB, 2*D)
    d = x_ref.shape[-1]
    t = jnp.tanh(x_ref[...].astype(compute_dtype)).astype(o_ref.dtype)
    # Two plain slice stores; with D % 128 == 0 both are unmasked, lane-dense.
    o_ref[:, :d] = t
    o_ref[:, d:] = t


def _device_kind():
    try:
        return jax.devices()[0].device_kind.lower()
    except Exception:
        return ""


def _default_vmem_budget_bytes():
    """Budget for double-buffered (input + 2x output) tiles, per generation."""
    kind = _device_kind()
    if "v6" in kind:
        return 32 << 20  # 128 MiB physical; raise scoped limit explicitly below.
    if "7" in kind:
        return 24 << 20  # 64 MiB physical per TC, stay <= 32 MiB scoped.
    return 12 << 20      # v5e / unknown: leave headroom under 16 MiB default.


def _compute_dtype(dtype):
    dt = jnp.dtype(dtype)
    if dt.itemsize >= 4:
        return dtype
    kind = _device_kind()
    if "v6" in kind or "7" in kind:
        return dtype          # bf16 VPU/EUP available: compute natively.
    return jnp.float32        # v5e and older: upcast sub-32-bit floats.


def _xla_fallback(x):
    return jnp.tanh(jnp.concatenate([x, x], axis=1).reshape(x.shape[0], -1))


def cat_view_tanh(x, *, max_block_rows=None, vmem_budget_bytes=None):
    """tanh(cat([x, x], dim=1)) for a 2-D input x of shape (B, D)."""
    B, D = x.shape
    itemsize = jnp.dtype(x.dtype).itemsize

    # Non-lane-aligned D would force masked stores + XLU lane rotates on the
    # second half; tiny B gives nothing to pipeline. XLA wins for these shapes.
    if D % 128 != 0 or B < 8:
        return _xla_fallback(x)

    # Sublane packing: 8 rows/vreg for 32-bit, 16 for 16-bit, 32 for 8-bit.
    row_pack = max(8, 32 // itemsize)

    budget = vmem_budget_bytes or _default_vmem_budget_bytes()
    per_row_bytes = 2 * (D + 2 * D) * itemsize  # double-buffered in + out

    # Extremely wide rows: even a minimal tile would overflow the budget.
    # TODO(synk): add a column-tiling path for very large D instead of XLA.
    if row_pack * per_row_bytes > budget:
        return _xla_fallback(x)

    # Row-tile selection: as big as the VMEM budget allows ...
    tb = budget // per_row_bytes
    if max_block_rows is not None:
        tb = min(tb, max_block_rows)
    # ... but keep >= 2 grid steps so v7x's two TensorCores both get work and
    # the input/output pipeline actually overlaps.
    if B >= 2 * row_pack:
        tb = min(tb, B // 2)
    tb = max(row_pack, (tb // row_pack) * row_pack)
    if tb >= B:
        tb = B  # single full-extent block (always legal)

    grid = (pl.cdiv(B, tb),)
    out_shape = jax.ShapeDtypeStruct((B, 2 * D), x.dtype)

    # Explicit scoped-VMEM limit: actual double-buffered tile bytes + headroom.
    tile_vmem_bytes = 2 * tb * 3 * D * itemsize
    vmem_limit = int(tile_vmem_bytes + (4 << 20))

    kernel = functools.partial(_cat_tanh_kernel, compute_dtype=_compute_dtype(x.dtype))

    return pl.pallas_call(
        kernel,
        out_shape=out_shape,
        grid=grid,
        in_specs=[pl.BlockSpec((tb, D), lambda i: (i, 0))],
        out_specs=pl.BlockSpec((tb, 2 * D), lambda i: (i, 0)),
        compiler_params=pltpu.CompilerParams(
            # Row tiles are independent: shard across both TensorCores on v7x.
            dimension_semantics=("parallel",),
            vmem_limit_bytes=vmem_limit,
        ),
        cost_estimate=pl.CostEstimate(
            flops=0,
            transcendentals=int(B * D),
            bytes_accessed=int(3 * B * D * itemsize),
        ),
    )(x)


def reference(x):
    y = jnp.concatenate([x, x], axis=1).reshape(x.shape[0], -1)
    return jnp.tanh(y)


if __name__ == "__main__":
    key = jax.random.PRNGKey(0)
    k_spec, k_small, k_big = jax.random.split(key, 3)

    # Spec-sized input (matches the PyTorch module: x = torch.randn(2, 3)).
    # D % 128 != 0 -> wrapper dispatches this to the plain-XLA path.
    x_spec = jax.random.normal(k_spec, (2, 3), dtype=jnp.float32)
    out_spec = jax.block_until_ready(cat_view_tanh(x_spec))
    assert out_spec.shape == (2, 6), out_spec.shape
    assert jnp.allclose(out_spec, reference(x_spec), atol=1e-6)

    # Small lane-aligned case: tb is capped at B//2 -> a 2-step parallel grid.
    x_small = jax.random.normal(k_small, (16, 128), dtype=jnp.float32)
    out_small = jax.block_until_ready(cat_view_tanh(x_small))
    assert out_small.shape == (16, 256), out_small.shape
    assert jnp.allclose(out_small, reference(x_small), atol=1e-6)

    # Larger tiled case with a forced multi-step grid (exercises pipelining and
    # a partial last block: 200 rows with 64-row tiles).
    x_big = jax.random.normal(k_big, (200, 256), dtype=jnp.float32)
    out_big = jax.block_until_ready(cat_view_tanh(x_big, max_block_rows=64))
    assert out_big.shape == (200, 512), out_big.shape
    assert jnp.allclose(out_big, reference(x_big), atol=1e-6)

    print("KERNEL_OK")
</pallas_src>

<mosaic_0001>
module attributes {stable_mosaic.version = 11 : i64} {
  func.func @_cat_tanh_kernel(%arg0: i32, %arg1: memref<8x128xf32, #tpu.memory_space<vmem>>, %arg2: memref<8x256xf32, #tpu.memory_space<vmem>>) attributes {dimension_semantics = [#tpu.dimension_semantics<parallel>], iteration_bounds = array<i64: 2>, scalar_prefetch = 0 : i64, scratch_operands = 0 : i64, tpu.core_type = #tpu.core_type<tc>, window_params = [{transform_indices = @transform_0, window_bounds = array<i64: 8, 128>}, {transform_indices = @transform_1, window_bounds = array<i64: 8, 256>}]} {
    %c0 = arith.constant 0 : index
    %c0_0 = arith.constant 0 : index
    %0 = vector.load %arg1[%c0, %c0_0] : memref<8x128xf32, #tpu.memory_space<vmem>>, vector<8x128xf32>
    %1 = math.tanh %0 : vector<8x128xf32>
    %c0_1 = arith.constant 0 : index
    %c0_2 = arith.constant 0 : index
    %2 = vector.load %arg2[%c0_1, %c0_2] : memref<8x256xf32, #tpu.memory_space<vmem>>, vector<8x128xf32>
    tpu.vector_store %arg2[%c0_1, %c0_2], %1 {strides = array<i32>} : memref<8x256xf32, #tpu.memory_space<vmem>>, vector<8x128xf32>,
    %c0_3 = arith.constant 0 : index
    %c128 = arith.constant 128 : index
    %3 = vector.load %arg2[%c0_3, %c128] : memref<8x256xf32, #tpu.memory_space<vmem>>, vector<8x128xf32>
    tpu.vector_store %arg2[%c0_3, %c128], %1 {strides = array<i32>} : memref<8x256xf32, #tpu.memory_space<vmem>>, vector<8x128xf32>,
    return
  }
  func.func @transform_0(%arg0: i32) -> (i32, i32) {
    %c0_i32 = arith.constant 0 : i32
    %c0_i32_0 = arith.constant 0 : i32
    return %arg0, %c0_i32 : i32, i32
  }
  func.func @transform_1(%arg0: i32) -> (i32, i32) {
    %c0_i32 = arith.constant 0 : i32
    %c0_i32_0 = arith.constant 0 : i32
    return %arg0, %c0_i32 : i32, i32
  }
}

</mosaic_0001>

<llo_original>
// kernel: tpu_custom_call.1
$region0: #{tpu_custom_call.1}
  #allocation0 [shape = 'u32[]', space=smem, size = 0x4, offset = 0x4, fixed_abs, tag = 'smem constant byte address 0x4 - core index']
  #allocation1 [shape = 'u32[144,128]{1,0:T(1,128)}', space=vmem, size = 0x12000, scoped, tag = 'internal scratch']
  %s0 = inlined_call_operand.hbm [shape: f32[16,128], index: 0, kind: input, shape index: {}]
  %s1 = inlined_call_operand.hbm [shape: f32[16,256], index: 1, kind: output, shape index: {}]
  %s2 = sld [smem:[#allocation0]]
  $region41: #{tpu_custom_call.1} parent=0
    _
  %s4 = ssub.s32 1, %s2
  %s5 = scalar_select 0, %s4, %s2
  $region1: #{tpu_custom_call.1} parent=0
    #allocation2 [shape = 'u8[8192]{0}', space=vmem, size = 0x2000, scoped, tag = 'input window, operand 0']
    #allocation3 [shape = 's32[2]{0}', space=sflag, size = 0x8, scoped, tag = 'scoped memory for tpu_custom_call.1']
    #allocation4 [shape = 's32[2]{0}', space=sflag, size = 0x8, scoped, tag = 'scoped memory for tpu_custom_call.1']
    #allocation5 [shape = 'u8[16384]{0}', space=vmem, size = 0x4000, scoped, tag = 'output window, operand 0']
    %6 = vsyncpa [#allocation3], 0
    %s7 = scalar_lea.sflag [#allocation3], 1
    %8 = vsyncpa %s7, 0
    %9 = vsyncpa [#allocation4], 0
    %s10 = scalar_lea.sflag [#allocation4], 1
    %11 = vsyncpa %s10, 0
    loop: start=0, step=1, limit=4
    $region2: #{tpu_custom_call.1} parent=1 // loop_pre_header
      _
    $region3: #{tpu_custom_call.1} parent=1 // loop_header
      %s13 = sphi 0, %s17
      %p14 = scmp.ge.s32.totalorder %s13, 4
      %s23 = sphi 0, %s25
      %s26 = sphi 0, %s23
      %s27 = sphi 0, %s26
      %s43 = sphi 0, %s27
      %s49 = sphi 0, %s51
      %s52 = sphi 0, %s49
      %s53 = sphi 0, %s52
      %s69 = sphi 0, %s53
    $region4: #{tpu_custom_call.1} parent=1 // loop_header_branch
      %16 = sbr.rel (%p14) target = $region8
    $region5: #{tpu_custom_call.1} parent=1 // loop_body
      %s18 = ssub.s32 %s13, 1
      %s19 = ssub.s32 %s13, 2
      %s20 = sadd.s32 %s13, 1
      %s21 = ssub.s32 %s13, %s20
      %p22 = scmp.eq.s32.totalorder %s21, 0
      %s24 = sadd.s32 %s23, 1
      %s25 = scalar_select %p22, %s23, %s24
      %p28 = pneg %p22
      %p29 = scmp.eq.s32.totalorder %s13, 1
      %p30 = por %p28, %p29
      %p31 = scmp.ne.s32.totalorder %s23, %s26
      %p32 = scmp.eq.s32.totalorder %s13, 0
      %p33 = por %p31, %p32
      %p34 = scmp.ne.s32.totalorder %s23, %s26
      %p35 = scmp.eq.s32.totalorder %s18, 1
      %p36 = por %p34, %p35
      %p37 = scmp.ne.s32.totalorder %s26, %s27
      %p38 = scmp.eq.s32.totalorder %s18, 0
      %p39 = por %p37, %p38
      %p40 = scmp.ne.s32.totalorder %s26, %s27
      %p41 = scmp.eq.s32.totalorder %s19, 1
      %p42 = por %p40, %p41
      %p44 = scmp.ne.s32.totalorder %s27, %s43
      %p45 = scmp.eq.s32.totalorder %s19, 0
      %p46 = por %p44, %p45
      %s47 = ssub.s32 %s13, %s20
      %p48 = scmp.eq.s32.totalorder %s47, 0
      %s50 = sadd.s32 %s49, 1
      %s51 = scalar_select %p48, %s49, %s50
      %p54 = pneg %p48
      %p55 = scmp.eq.s32.totalorder %s13, 1
      %p56 = por %p54, %p55
      %p57 = scmp.ne.s32.totalorder %s49, %s52
      %p58 = scmp.eq.s32.totalorder %s13, 0
      %p59 = por %p57, %p58
      %p60 = scmp.ne.s32.totalorder %s49, %s52
      %p61 = scmp.eq.s32.totalorder %s18, 1
      %p62 = por %p60, %p61
      %p63 = scmp.ne.s32.totalorder %s52, %s53
      %p64 = scmp.eq.s32.totalorder %s18, 0
      %p65 = por %p63, %p64
      %p66 = scmp.ne.s32.totalorder %s52, %s53
      %p67 = scmp.eq.s32.totalorder %s19, 1
      %p68 = por %p66, %p67
      %p70 = scmp.ne.s32.totalorder %s53, %s69
      %p71 = scmp.eq.s32.totalorder %s19, 0
      %p72 = por %p70, %p71
      %p73 = scmp.le.s32.totalorder 1, %s13
      %p74 = scmp.lt.s32.totalorder %s13, 3
      %p75 = pnand %p73, %p74
      %p76 = pneg %p75
      // Predicated region
      $region9: #{tpu_custom_call.1} parent=5 // pred_check
        _
      $region10: #{tpu_custom_call.1} parent=5 // pred_check_branch
        %78 = sbr.rel (%p75) target = $region12
      $region11: #{tpu_custom_call.1} parent=5 // pred_region
        %s79 = ssub.s32 %s13, 1
      $region12: #{tpu_custom_call.1} parent=5 // pred_fallthru
        _
      %p80 = scmp.lt.s32.totalorder %s13, 2
      // Predicated region
      $region13: #{tpu_custom_call.1} parent=5 // pred_check
        %p81 = pneg %p80
      $region14: #{tpu_custom_call.1} parent=5 // pred_check_branch
        %83 = sbr.rel (%p81) target = $region16
      $region15: #{tpu_custom_call.1} parent=5 // pred_region
        // Predicated region
        $region17: #{tpu_custom_call.1} parent=15 // pred_check
          %p84 = pneg %p33
        $region18: #{tpu_custom_call.1} parent=15 // pred_check_branch
          %86 = sbr.rel (%p84) target = $region20
        $region19: #{tpu_custom_call.1} parent=15 // pred_region
          %s87 = sand.u32 %s23, 1
          %s88 = scalar_lea.sflag [#allocation3], %s87
          %s89 = sand.u32 %s23, 1
          %s90 = smul.addr %s89, 8
          %s91 = scalar_lea.vmem [#allocation2], %s90
          %s93 = ssub.s32 128, 128
          %94 = vsyncadd %s88, %s93
          %s95 = smul.addr %s13, 128
          %s96 = scalar_lea.hbm %s0, %s95
          %s98 = sshll.u32 %s91, 4
          %s99 = int_to_ptr.vmem [resolvable:$true] %s98
          %101 = dma.hbm_to_vmem [thread:$0]  %s96, 128, %s99, %s88
        $region20: #{tpu_custom_call.1} parent=15 // pred_fallthru
          _
      $region16: #{tpu_custom_call.1} parent=5 // pred_fallthru
        _
      %p102 = scmp.le.s32.totalorder 1, %s13
      %p103 = scmp.lt.s32.totalorder %s13, 3
      %p104 = pnand %p102, %p103
      %p105 = pneg %p104
      // Predicated region
      $region21: #{tpu_custom_call.1} parent=5 // pred_check
        _
      $region22: #{tpu_custom_call.1} parent=5 // pred_check_branch
        %107 = sbr.rel (%p104) target = $region24
      $region23: #{tpu_custom_call.1} parent=5 // pred_region
        %s108 = ssub.s32 %s13, 1
        %s109 = sand.u32 %s26, 1
        %s110 = scalar_lea.sflag [#allocation3], %s109
        %s111 = sand.u32 %s26, 1
        %s112 = smul.addr %s111, 8
        %s113 = scalar_lea.vmem [#allocation2], %s112
        // Predicated region
        $region25: #{tpu_custom_call.1} parent=23 // pred_check
          %p114 = pneg %p39
        $region26: #{tpu_custom_call.1} parent=23 // pred_check_branch
          %116 = sbr.rel (%p114) target = $region28
        $region27: #{tpu_custom_call.1} parent=23 // pred_region
          %117 = dma.done %s110, 128
        $region28: #{tpu_custom_call.1} parent=23 // pred_fallthru
          _
        %s118 = sand.u32 %s26, 1
        %s119 = scalar_lea.sflag [#allocation3], %s118
        %s120 = sand.u32 %s26, 1
        %s121 = smul.addr %s120, 8
        %s122 = scalar_lea.vmem [#allocation2], %s121
        %p123 = pneg %p39
        %p124 = pneg %p36
        %p125 = pneg %p65
        %p126 = pneg %p62
        %s127 = sand.u32 %s52, 1
        %s128 = scalar_lea.sflag [#allocation4], %s127
        %s129 = sand.u32 %s52, 1
        %s130 = smul.addr %s129, 16
        %s131 = scalar_lea.vmem [#allocation5], %s130
        %v132 = vld [vmem:[%s113] sm:$0xff]
        %v133 = vtanh.pop %v132
        %134 = vst [vmem:[%s131] sm:$0xff] %v133
        %135 = vst [vmem:[%s131 + $0x8] sm:$0xff] %v133
        %s136 = sand.u32 %s52, 1
        %s137 = scalar_lea.sflag [#allocation4], %s136
        %s138 = sand.u32 %s52, 1
        %s139 = smul.addr %s138, 16
        %s140 = scalar_lea.vmem [#allocation5], %s139
        // Predicated region
        $region29: #{tpu_custom_call.1} parent=23 // pred_check
          %p141 = pneg %p62
        $region30: #{tpu_custom_call.1} parent=23 // pred_check_branch
          %143 = sbr.rel (%p141) target = $region32
        $region31: #{tpu_custom_call.1} parent=23 // pred_region
          %s145 = ssub.s32 256, 256
          %146 = vsyncadd %s137, %s145
          %s147 = smul.addr %s18, 2
          %s148 = smul.addr %s147, 128
          %s149 = scalar_lea.hbm %s1, %s148
          %s151 = sshll.u32 %s140, 4
          %s152 = int_to_ptr.vmem [resolvable:$true] %s151
          %154 = dma.vmem_to_hbm [thread:$0]  %s152, 256, %s149, %s137
        $region32: #{tpu_custom_call.1} parent=23 // pred_fallthru
          _
      $region24: #{tpu_custom_call.1} parent=5 // pred_fallthru
        _
      %p155 = scmp.le.s32.totalorder 2, %s13
      // Predicated region
      $region33: #{tpu_custom_call.1} parent=5 // pred_check
        %p156 = pneg %p155
      $region34: #{tpu_custom_call.1} parent=5 // pred_check_branch
        %158 = sbr.rel (%p156) target = $region36
      $region35: #{tpu_custom_call.1} parent=5 // pred_region
        %s159 = ssub.s32 %s13, 2
        // Predicated region
        $region37: #{tpu_custom_call.1} parent=35 // pred_check
          %p160 = pneg %p68
        $region38: #{tpu_custom_call.1} parent=35 // pred_check_branch
          %162 = sbr.rel (%p160) target = $region40
        $region39: #{tpu_custom_call.1} parent=35 // pred_region
          %s163 = sand.u32 %s53, 1
          %s164 = scalar_lea.sflag [#allocation4], %s163
          %s165 = sand.u32 %s53, 1
          %s166 = smul.addr %s165, 16
          %s167 = scalar_lea.vmem [#allocation5], %s166
          %168 = dma.done %s164, 256
        $region40: #{tpu_custom_call.1} parent=35 // pred_fallthru
          _
      $region36: #{tpu_custom_call.1} parent=5 // pred_fallthru
        _
    $region6: #{tpu_custom_call.1} parent=1 // loop_footer
      %s17 = sadd.s32 1, %s13
    $region7: #{tpu_custom_call.1} parent=1 // loop_footer_branch
      %12 = sbr.rel target = $region3
    $region8: #{tpu_custom_call.1} parent=1 // loop_exit
      _
    %169 = vsyncpa [#allocation3], 1
    %s170 = scalar_lea.sflag [#allocation3], 1
    %171 = vsyncpa %s170, 1
    %172 = vsyncpa [#allocation4], 1
    %s173 = scalar_lea.sflag [#allocation4], 1
    %174 = vsyncpa %s173, 1

</llo_original>
